<compile_context>
chip_gen: v7x
topology: tpu7x:2x2x1
jax: 0.10.0
libtpu: 0.0.40
codegen_flags: <defaults>
</compile_context>

<pallas_src>
import jax
import jax.numpy as jnp
from jax.experimental import pallas as pl
from jax.experimental.pallas import tpu as pltpu


def _round_up(x, m):
    return (x + m - 1) // m * m


def _mlp_kernel(x_ref, w1_ref, b1_ref, w2_ref, b2_ref, o_ref):
    # x_ref: (TM, Din_p) bf16   w1_ref: (Din_p, Din_p) bf16   b1_ref: (1, Din_p) f32
    # w2_ref: (Din_p, Dout_p) bf16   b2_ref: (1, Dout_p) f32   o_ref: (TM, Dout_p) f32
    x = x_ref[...]
    # MXU pass 1 (bf16 in, f32 accumulate); bias folded in as accumulator init.
    h = b1_ref[...] + jnp.dot(x, w1_ref[...], preferred_element_type=jnp.float32)
    h = jnp.maximum(h, 0.0)                                  # f32 ReLU epilogue (VPU)
    # MXU pass 2.
    y = b2_ref[...] + jnp.dot(h.astype(jnp.bfloat16), w2_ref[...],
                              preferred_element_type=jnp.float32)
    o_ref[...] = y.astype(o_ref.dtype)


def fully_connected_forward(x, w1, b1, w2, b2, *, tile_m=128):
    """x: (B, D_in); w1: (D_in, D_in); b1: (D_in,); w2: (D_in, D_out); b2: (D_out,).

    Weights are stored pre-transposed as (in_features, out_features) so the
    kernel computes plain x @ W + b on the MXU.
    """
    B, D_in = x.shape
    D_out = w2.shape[1]

    # Lane-dense padding (multiples of 128) and a batch row tile (multiple of 8).
    D_in_p = _round_up(D_in, 128)
    D_out_p = _round_up(D_out, 128)
    tile_m = min(tile_m, _round_up(B, 8))
    B_p = _round_up(B, tile_m)

    # Zero-padded, bf16 matmul operands; biases stay f32 (accumulator init).
    xp = jnp.zeros((B_p, D_in_p), jnp.bfloat16).at[:B, :D_in].set(
        x.astype(jnp.bfloat16))
    w1p = jnp.zeros((D_in_p, D_in_p), jnp.bfloat16).at[:D_in, :D_in].set(
        w1.astype(jnp.bfloat16))
    b1p = jnp.zeros((1, D_in_p), jnp.float32).at[0, :D_in].set(
        b1.astype(jnp.float32))
    w2p = jnp.zeros((D_in_p, D_out_p), jnp.bfloat16).at[:D_in, :D_out].set(
        w2.astype(jnp.bfloat16))
    b2p = jnp.zeros((1, D_out_p), jnp.float32).at[0, :D_out].set(
        b2.astype(jnp.float32))

    grid = (B_p // tile_m,)

    out = pl.pallas_call(
        _mlp_kernel,
        out_shape=jax.ShapeDtypeStruct((B_p, D_out_p), jnp.float32),
        grid_spec=pl.GridSpec(
            grid=grid,
            in_specs=[
                # Row tile of activations walks the grid...
                pl.BlockSpec((tile_m, D_in_p), lambda i: (i, 0)),
                # ...weights/biases stay resident in VMEM (constant index_map).
                pl.BlockSpec((D_in_p, D_in_p), lambda i: (0, 0)),
                pl.BlockSpec((1, D_in_p), lambda i: (0, 0)),
                pl.BlockSpec((D_in_p, D_out_p), lambda i: (0, 0)),
                pl.BlockSpec((1, D_out_p), lambda i: (0, 0)),
            ],
            out_specs=pl.BlockSpec((tile_m, D_out_p), lambda i: (i, 0)),
        ),
        compiler_params=pltpu.CompilerParams(
            dimension_semantics=("parallel",),   # independent batch tiles (megacore on v7x)
            vmem_limit_bytes=32 * 1024 * 1024,
        ),
    )(xp, w1p, b1p, w2p, b2p)

    return out[:B, :D_out].astype(x.dtype)


def _init_linear(key, in_features, out_features):
    """Deterministic init mimicking nn.Linear's uniform(-1/sqrt(in), 1/sqrt(in)).
    Returns weight already transposed to (in_features, out_features)."""
    kw, kb = jax.random.split(key)
    bound = 1.0 / jnp.sqrt(jnp.float32(in_features))
    w = jax.random.uniform(kw, (in_features, out_features), jnp.float32,
                           minval=-bound, maxval=bound)
    b = jax.random.uniform(kb, (out_features,), jnp.float32,
                           minval=-bound, maxval=bound)
    return w, b


if __name__ == "__main__":
    key = jax.random.PRNGKey(0)
    k_x, k_fc1, k_fc2 = jax.random.split(key, 3)

    # Small shapes consistent with FullyConnetedNetwork(input_dim, output_dim);
    # batch=256 so the batch grid axis actually has >1 step (tile_m=128 -> grid=(2,)).
    batch, input_dim, output_dim = 256, 32, 16

    x = jax.random.normal(k_x, (batch, input_dim), jnp.float32)
    w1, b1 = _init_linear(k_fc1, input_dim, input_dim)   # fc1: input_dim -> input_dim
    w2, b2 = _init_linear(k_fc2, input_dim, output_dim)  # fc2: input_dim -> output_dim

    y = fully_connected_forward(x, w1, b1, w2, b2)
    y = jax.block_until_ready(y)

    # Pure-JAX f32 reference; tolerance loosened for bf16 MXU inputs.
    ref = jnp.maximum(x @ w1 + b1, 0.0) @ w2 + b2
    assert y.shape == (batch, output_dim)
    assert jnp.allclose(y, ref, atol=3e-2, rtol=3e-2)

    print("KERNEL_OK")
</pallas_src>

<mosaic_0001>
module attributes {stable_mosaic.version = 11 : i64} {
  func.func @_mlp_kernel(%arg0: i32, %arg1: memref<128x128xbf16, #tpu.memory_space<vmem>>, %arg2: memref<128x128xbf16, #tpu.memory_space<vmem>>, %arg3: memref<1x128xf32, #tpu.memory_space<vmem>>, %arg4: memref<128x128xbf16, #tpu.memory_space<vmem>>, %arg5: memref<1x128xf32, #tpu.memory_space<vmem>>, %arg6: memref<128x128xf32, #tpu.memory_space<vmem>>) attributes {dimension_semantics = [#tpu.dimension_semantics<parallel>], iteration_bounds = array<i64: 2>, scalar_prefetch = 0 : i64, scratch_operands = 0 : i64, tpu.core_type = #tpu.core_type<tc>, window_params = [{transform_indices = @transform_0, window_bounds = array<i64: 128, 128>}, {pipeline_mode = #tpu.pipeline_mode<synchronous>, transform_indices = @transform_1, window_bounds = array<i64: 128, 128>}, {pipeline_mode = #tpu.pipeline_mode<synchronous>, transform_indices = @transform_2, window_bounds = array<i64: 1, 128>}, {pipeline_mode = #tpu.pipeline_mode<synchronous>, transform_indices = @transform_3, window_bounds = array<i64: 128, 128>}, {pipeline_mode = #tpu.pipeline_mode<synchronous>, transform_indices = @transform_4, window_bounds = array<i64: 1, 128>}, {transform_indices = @transform_5, window_bounds = array<i64: 128, 128>}]} {
    %c0 = arith.constant 0 : index
    %c0_0 = arith.constant 0 : index
    %0 = vector.load %arg1[%c0, %c0_0] : memref<128x128xbf16, #tpu.memory_space<vmem>>, vector<128x128xbf16>
    %c0_1 = arith.constant 0 : index
    %c0_2 = arith.constant 0 : index
    %1 = vector.load %arg3[%c0_1, %c0_2] : memref<1x128xf32, #tpu.memory_space<vmem>>, vector<1x128xf32>
    %c0_3 = arith.constant 0 : index
    %c0_4 = arith.constant 0 : index
    %2 = vector.load %arg2[%c0_3, %c0_4] : memref<128x128xbf16, #tpu.memory_space<vmem>>, vector<128x128xbf16>
    %cst = arith.constant dense<0.000000e+00> : vector<128x128xf32>
    %3 = tpu.matmul %0, %2, %cst {dimension_numbers = #tpu.dot_dimension_numbers<[1], [0], [0], [1], [0, 0, 1, 1], [], []>} : vector<128x128xbf16>, vector<128x128xbf16>, vector<128x128xf32> -> vector<128x128xf32>
    %4 = vector.broadcast %1 : vector<1x128xf32> to vector<128x128xf32>
    %5 = arith.addf %4, %3 : vector<128x128xf32>
    %cst_5 = arith.constant 0.000000e+00 : f32
    %6 = vector.broadcast %cst_5 : f32 to vector<128x128xf32>
    %7 = arith.maximumf %5, %6 : vector<128x128xf32>
    %c0_6 = arith.constant 0 : index
    %c0_7 = arith.constant 0 : index
    %8 = vector.load %arg5[%c0_6, %c0_7] : memref<1x128xf32, #tpu.memory_space<vmem>>, vector<1x128xf32>
    %9 = arith.truncf %7 : vector<128x128xf32> to vector<128x128xbf16>
    %c0_8 = arith.constant 0 : index
    %c0_9 = arith.constant 0 : index
    %10 = vector.load %arg4[%c0_8, %c0_9] : memref<128x128xbf16, #tpu.memory_space<vmem>>, vector<128x128xbf16>
    %cst_10 = arith.constant dense<0.000000e+00> : vector<128x128xf32>
    %11 = tpu.matmul %9, %10, %cst_10 {dimension_numbers = #tpu.dot_dimension_numbers<[1], [0], [0], [1], [0, 0, 1, 1], [], []>} : vector<128x128xbf16>, vector<128x128xbf16>, vector<128x128xf32> -> vector<128x128xf32>
    %12 = vector.broadcast %8 : vector<1x128xf32> to vector<128x128xf32>
    %13 = arith.addf %12, %11 : vector<128x128xf32>
    %c0_11 = arith.constant 0 : index
    %c0_12 = arith.constant 0 : index
    %14 = vector.load %arg6[%c0_11, %c0_12] : memref<128x128xf32, #tpu.memory_space<vmem>>, vector<128x128xf32>
    tpu.vector_store %arg6[%c0_11, %c0_12], %13 {strides = array<i32>} : memref<128x128xf32, #tpu.memory_space<vmem>>, vector<128x128xf32>,
    return
  }
  func.func @transform_0(%arg0: i32) -> (i32, i32) {
    %c0_i32 = arith.constant 0 : i32
    %c0_i32_0 = arith.constant 0 : i32
    return %arg0, %c0_i32 : i32, i32
  }
  func.func @transform_1(%arg0: i32) -> (i32, i32) {
    %c0_i32 = arith.constant 0 : i32
    %c0_i32_0 = arith.constant 0 : i32
    %c0_i32_1 = arith.constant 0 : i32
    return %c0_i32, %c0_i32_0 : i32, i32
  }
  func.func @transform_2(%arg0: i32) -> (i32, i32) {
    %c0_i32 = arith.constant 0 : i32
    %c0_i32_0 = arith.constant 0 : i32
    %c0_i32_1 = arith.constant 0 : i32
    return %c0_i32, %c0_i32_0 : i32, i32
  }
  func.func @transform_3(%arg0: i32) -> (i32, i32) {
    %c0_i32 = arith.constant 0 : i32
    %c0_i32_0 = arith.constant 0 : i32
    %c0_i32_1 = arith.constant 0 : i32
    return %c0_i32, %c0_i32_0 : i32, i32
  }
  func.func @transform_4(%arg0: i32) -> (i32, i32) {
    %c0_i32 = arith.constant 0 : i32
    %c0_i32_0 = arith.constant 0 : i32
    %c0_i32_1 = arith.constant 0 : i32
    return %c0_i32, %c0_i32_0 : i32, i32
  }
  func.func @transform_5(%arg0: i32) -> (i32, i32) {
    %c0_i32 = arith.constant 0 : i32
    %c0_i32_0 = arith.constant 0 : i32
    return %arg0, %c0_i32 : i32, i32
  }
}

</mosaic_0001>

<llo_original>
// kernel: tpu_custom_call.1
$region0: #{tpu_custom_call.1}
  #allocation0 [shape = 'u32[]', space=smem, size = 0x4, offset = 0x4, fixed_abs, tag = 'smem constant byte address 0x4 - core index']
  #allocation1 [shape = 'u32[144,128]{1,0:T(1,128)}', space=vmem, size = 0x12000, scoped, tag = 'internal scratch']
  %s0 = inlined_call_operand.hbm [shape: bf16[256,128], index: 0, kind: input, shape index: {}]
  %s1 = inlined_call_operand.hbm [shape: bf16[128,128], index: 1, kind: input, shape index: {}]
  %s2 = inlined_call_operand.vmem [shape: f32[1,128], index: 2, kind: input, shape index: {}]
  %s3 = inlined_call_operand.hbm [shape: bf16[128,128], index: 3, kind: input, shape index: {}]
  %s4 = inlined_call_operand.vmem [shape: f32[1,128], index: 4, kind: input, shape index: {}]
  %s5 = inlined_call_operand.hbm [shape: f32[256,128], index: 5, kind: output, shape index: {}]
  %s6 = sld [smem:[#allocation0]]
  $region65: #{tpu_custom_call.1} parent=0
    _
  %s8 = ssub.s32 1, %s6
  %s9 = scalar_select 0, %s8, %s6
  $region1: #{tpu_custom_call.1} parent=0
    #allocation2 [shape = 'u8[65536]{0}', space=vmem, size = 0x10000, scoped, tag = 'input window, operand 0']
    #allocation3 [shape = 's32[2]{0}', space=sflag, size = 0x8, scoped, tag = 'scoped memory for tpu_custom_call.1']
    #allocation4 [shape = 's32[2]{0}', space=sflag, size = 0x8, scoped, tag = 'scoped memory for tpu_custom_call.1']
    #allocation5 [shape = 'u8[32768]{0}', space=vmem, size = 0x8000, scoped, tag = 'input window, operand 1, single buffered']
    #allocation6 [shape = 's32[1]{0}', space=sflag, size = 0x4, scoped, tag = 'scoped memory for tpu_custom_call.1']
    #allocation7 [shape = 'u8[32768]{0}', space=vmem, size = 0x8000, scoped, tag = 'input window, operand 3, single buffered']
    #allocation8 [shape = 'u8[131072]{0}', space=vmem, size = 0x20000, scoped, tag = 'output window, operand 0']
    %10 = vsyncpa [#allocation3], 0
    %s11 = scalar_lea.sflag [#allocation3], 1
    %12 = vsyncpa %s11, 0
    %13 = vsyncpa [#allocation6], 0
    %14 = vsyncpa [#allocation4], 0
    %s15 = scalar_lea.sflag [#allocation4], 1
    %16 = vsyncpa %s15, 0
    loop: start=0, step=1, limit=4
    $region2: #{tpu_custom_call.1} parent=1 // loop_pre_header
      _
    $region3: #{tpu_custom_call.1} parent=1 // loop_header
      %s18 = sphi 0, %s22
      %p19 = scmp.ge.s32.totalorder %s18, 4
      %s28 = sphi 0, %s30
      %s31 = sphi 0, %s28
      %s32 = sphi 0, %s31
      %s48 = sphi 0, %s32
      %s52 = sphi 0, %s52
      %s54 = sphi 0, %s52
      %s55 = sphi 0, %s54
      %s69 = sphi 0, %s55
      %s73 = sphi 0, %s73
      %s75 = sphi 0, %s73
      %s76 = sphi 0, %s75
      %s90 = sphi 0, %s76
      %s94 = sphi 0, %s94
      %s96 = sphi 0, %s94
      %s97 = sphi 0, %s96
      %s111 = sphi 0, %s97
      %s115 = sphi 0, %s115
      %s117 = sphi 0, %s115
      %s118 = sphi 0, %s117
      %s132 = sphi 0, %s118
      %s138 = sphi 0, %s140
      %s141 = sphi 0, %s138
      %s142 = sphi 0, %s141
      %s158 = sphi 0, %s142
    $region4: #{tpu_custom_call.1} parent=1 // loop_header_branch
      %21 = sbr.rel (%p19) target = $region8
    $region5: #{tpu_custom_call.1} parent=1 // loop_body
      %s23 = ssub.s32 %s18, 1
      %s24 = ssub.s32 %s18, 2
      %s25 = sadd.s32 %s18, 1
      %s26 = ssub.s32 %s18, %s25
      %p27 = scmp.eq.s32.totalorder %s26, 0
      %s29 = sadd.s32 %s28, 1
      %s30 = scalar_select %p27, %s28, %s29
      %p33 = pneg %p27
      %p34 = scmp.eq.s32.totalorder %s18, 1
      %p35 = por %p33, %p34
      %p36 = scmp.ne.s32.totalorder %s28, %s31
      %p37 = scmp.eq.s32.totalorder %s18, 0
      %p38 = por %p36, %p37
      %p39 = scmp.ne.s32.totalorder %s28, %s31
      %p40 = scmp.eq.s32.totalorder %s23, 1
      %p41 = por %p39, %p40
      %p42 = scmp.ne.s32.totalorder %s31, %s32
      %p43 = scmp.eq.s32.totalorder %s23, 0
      %p44 = por %p42, %p43
      %p45 = scmp.ne.s32.totalorder %s31, %s32
      %p46 = scmp.eq.s32.totalorder %s24, 1
      %p47 = por %p45, %p46
      %p49 = scmp.ne.s32.totalorder %s32, %s48
      %p50 = scmp.eq.s32.totalorder %s24, 0
      %p51 = por %p49, %p50
      %s53 = sadd.s32 %s52, 1
      %p56 = scmp.eq.s32.totalorder %s18, 1
      %p57 = scmp.ne.s32.totalorder %s52, %s54
      %p58 = scmp.eq.s32.totalorder %s18, 0
      %p59 = por %p57, %p58
      %p60 = scmp.ne.s32.totalorder %s52, %s54
      %p61 = scmp.eq.s32.totalorder %s23, 1
      %p62 = por %p60, %p61
      %p63 = scmp.ne.s32.totalorder %s54, %s55
      %p64 = scmp.eq.s32.totalorder %s23, 0
      %p65 = por %p63, %p64
      %p66 = scmp.ne.s32.totalorder %s54, %s55
      %p67 = scmp.eq.s32.totalorder %s24, 1
      %p68 = por %p66, %p67
      %p70 = scmp.ne.s32.totalorder %s55, %s69
      %p71 = scmp.eq.s32.totalorder %s24, 0
      %p72 = por %p70, %p71
      %s74 = sadd.s32 %s73, 1
      %p77 = scmp.eq.s32.totalorder %s18, 1
      %p78 = scmp.ne.s32.totalorder %s73, %s75
      %p79 = scmp.eq.s32.totalorder %s18, 0
      %p80 = por %p78, %p79
      %p81 = scmp.ne.s32.totalorder %s73, %s75
      %p82 = scmp.eq.s32.totalorder %s23, 1
      %p83 = por %p81, %p82
      %p84 = scmp.ne.s32.totalorder %s75, %s76
      %p85 = scmp.eq.s32.totalorder %s23, 0
      %p86 = por %p84, %p85
      %p87 = scmp.ne.s32.totalorder %s75, %s76
      %p88 = scmp.eq.s32.totalorder %s24, 1
      %p89 = por %p87, %p88
      %p91 = scmp.ne.s32.totalorder %s76, %s90
      %p92 = scmp.eq.s32.totalorder %s24, 0
      %p93 = por %p91, %p92
      %s95 = sadd.s32 %s94, 1
      %p98 = scmp.eq.s32.totalorder %s18, 1
      %p99 = scmp.ne.s32.totalorder %s94, %s96
      %p100 = scmp.eq.s32.totalorder %s18, 0
      %p101 = por %p99, %p100
      %p102 = scmp.ne.s32.totalorder %s94, %s96
      %p103 = scmp.eq.s32.totalorder %s23, 1
      %p104 = por %p102, %p103
      %p105 = scmp.ne.s32.totalorder %s96, %s97
      %p106 = scmp.eq.s32.totalorder %s23, 0
      %p107 = por %p105, %p106
      %p108 = scmp.ne.s32.totalorder %s96, %s97
      %p109 = scmp.eq.s32.totalorder %s24, 1
      %p110 = por %p108, %p109
      %p112 = scmp.ne.s32.totalorder %s97, %s111
      %p113 = scmp.eq.s32.totalorder %s24, 0
      %p114 = por %p112, %p113
      %s116 = sadd.s32 %s115, 1
      %p119 = scmp.eq.s32.totalorder %s18, 1
      %p120 = scmp.ne.s32.totalorder %s115, %s117
      %p121 = scmp.eq.s32.totalorder %s18, 0
      %p122 = por %p120, %p121
      %p123 = scmp.ne.s32.totalorder %s115, %s117
      %p124 = scmp.eq.s32.totalorder %s23, 1
      %p125 = por %p123, %p124
      %p126 = scmp.ne.s32.totalorder %s117, %s118
      %p127 = scmp.eq.s32.totalorder %s23, 0
      %p128 = por %p126, %p127
      %p129 = scmp.ne.s32.totalorder %s117, %s118
      %p130 = scmp.eq.s32.totalorder %s24, 1
      %p131 = por %p129, %p130
      %p133 = scmp.ne.s32.totalorder %s118, %s132
      %p134 = scmp.eq.s32.totalorder %s24, 0
      %p135 = por %p133, %p134
      %s136 = ssub.s32 %s18, %s25
      %p137 = scmp.eq.s32.totalorder %s136, 0
      %s139 = sadd.s32 %s138, 1
      %s140 = scalar_select %p137, %s138, %s139
      %p143 = pneg %p137
      %p144 = scmp.eq.s32.totalorder %s18, 1
      %p145 = por %p143, %p144
      %p146 = scmp.ne.s32.totalorder %s138, %s141
      %p147 = scmp.eq.s32.totalorder %s18, 0
      %p148 = por %p146, %p147
      %p149 = scmp.ne.s32.totalorder %s138, %s141
      %p150 = scmp.eq.s32.totalorder %s23, 1
      %p151 = por %p149, %p150
      %p152 = scmp.ne.s32.totalorder %s141, %s142
      %p153 = scmp.eq.s32.totalorder %s23, 0
      %p154 = por %p152, %p153
      %p155 = scmp.ne.s32.totalorder %s141, %s142
      %p156 = scmp.eq.s32.totalorder %s24, 1
      %p157 = por %p155, %p156
      %p159 = scmp.ne.s32.totalorder %s142, %s158
      %p160 = scmp.eq.s32.totalorder %s24, 0
      %p161 = por %p159, %p160
      %p162 = scmp.le.s32.totalorder 1, %s18
      %p163 = scmp.lt.s32.totalorder %s18, 3
      %p164 = pnand %p162, %p163
      %p165 = pneg %p164
      // Predicated region
      $region9: #{tpu_custom_call.1} parent=5 // pred_check
        _
      $region10: #{tpu_custom_call.1} parent=5 // pred_check_branch
        %167 = sbr.rel (%p164) target = $region12
      $region11: #{tpu_custom_call.1} parent=5 // pred_region
        %s168 = ssub.s32 %s18, 1
        // Predicated region
        $region13: #{tpu_custom_call.1} parent=11 // pred_check
          %p169 = pneg %p65
        $region14: #{tpu_custom_call.1} parent=11 // pred_check_branch
          %171 = sbr.rel (%p169) target = $region16
        $region15: #{tpu_custom_call.1} parent=11 // pred_region
          %s173 = ssub.s32 1024, 1024
          %174 = vsyncadd [#allocation6], %s173
          %s175 = sshll.u32 [#allocation5], 4
          %s176 = int_to_ptr.vmem [resolvable:$true] %s175
          %181 = dma.hbm_to_vmem [thread:$0]  %s1, 1024, %s176, [#allocation6], 64, 64, 4
        $region16: #{tpu_custom_call.1} parent=11 // pred_fallthru
          _
        // Predicated region
        $region17: #{tpu_custom_call.1} parent=11 // pred_check
          %p182 = pneg %p86
        $region18: #{tpu_custom_call.1} parent=11 // pred_check_branch
          %184 = sbr.rel (%p182) target = $region20
        $region19: #{tpu_custom_call.1} parent=11 // pred_region
          _
        $region20: #{tpu_custom_call.1} parent=11 // pred_fallthru
          _
        // Predicated region
        $region21: #{tpu_custom_call.1} parent=11 // pred_check
          %p185 = pneg %p107
        $region22: #{tpu_custom_call.1} parent=11 // pred_check_branch
          %187 = sbr.rel (%p185) target = $region24
        $region23: #{tpu_custom_call.1} parent=11 // pred_region
          %s189 = ssub.s32 1024, 1024
          %190 = vsyncadd [#allocation6], %s189
          %s191 = sshll.u32 [#allocation7], 4
          %s192 = int_to_ptr.vmem [resolvable:$true] %s191
          %197 = dma.hbm_to_vmem [thread:$0]  %s3, 1024, %s192, [#allocation6], 64, 64, 4
        $region24: #{tpu_custom_call.1} parent=11 // pred_fallthru
          _
        // Predicated region
        $region25: #{tpu_custom_call.1} parent=11 // pred_check
          %p198 = pneg %p128
        $region26: #{tpu_custom_call.1} parent=11 // pred_check_branch
          %200 = sbr.rel (%p198) target = $region28
        $region27: #{tpu_custom_call.1} parent=11 // pred_region
          _
        $region28: #{tpu_custom_call.1} parent=11 // pred_fallthru
          _
      $region12: #{tpu_custom_call.1} parent=5 // pred_fallthru
        _
      %p201 = scmp.lt.s32.totalorder %s18, 2
      // Predicated region
      $region29: #{tpu_custom_call.1} parent=5 // pred_check
        %p202 = pneg %p201
      $region30: #{tpu_custom_call.1} parent=5 // pred_check_branch
        %204 = sbr.rel (%p202) target = $region32
      $region31: #{tpu_custom_call.1} parent=5 // pred_region
        // Predicated region
        $region33: #{tpu_custom_call.1} parent=31 // pred_check
          %p205 = pneg %p38
        $region34: #{tpu_custom_call.1} parent=31 // pred_check_branch
          %207 = sbr.rel (%p205) target = $region36
        $region35: #{tpu_custom_call.1} parent=31 // pred_region
          %s208 = sand.u32 %s28, 1
          %s209 = scalar_lea.sflag [#allocation3], %s208
          %s210 = sand.u32 %s28, 1
          %s211 = smul.addr %s210, 64
          %s212 = scalar_lea.vmem [#allocation2], %s211
          %s213 = smul.u32 16, %s18
          %s215 = ssub.s32 1024, 1024
          %216 = vsyncadd %s209, %s215
          %s217 = smul.addr %s213, 64
          %s218 = scalar_lea.hbm %s0, %s217
          %s219 = sshll.u32 %s212, 4
          %s220 = int_to_ptr.vmem [resolvable:$true] %s219
          %225 = dma.hbm_to_vmem [thread:$0]  %s218, 1024, %s220, %s209, 64, 64, 4
        $region36: #{tpu_custom_call.1} parent=31 // pred_fallthru
          _
      $region32: #{tpu_custom_call.1} parent=5 // pred_fallthru
        _
      %p226 = scmp.le.s32.totalorder 1, %s18
      %p227 = scmp.lt.s32.totalorder %s18, 3
      %p228 = pnand %p226, %p227
      %p229 = pneg %p228
      // Predicated region
      $region37: #{tpu_custom_call.1} parent=5 // pred_check
        _
      $region38: #{tpu_custom_call.1} parent=5 // pred_check_branch
        %231 = sbr.rel (%p228) target = $region40
      $region39: #{tpu_custom_call.1} parent=5 // pred_region
        %s232 = ssub.s32 %s18, 1
        %s233 = sand.u32 %s31, 1
        %s234 = scalar_lea.sflag [#allocation3], %s233
        %s235 = sand.u32 %s31, 1
        %s236 = smul.addr %s235, 64
        %s237 = scalar_lea.vmem [#allocation2], %s236
        // Predicated region
        $region41: #{tpu_custom_call.1} parent=39 // pred_check
          %p238 = pneg %p44
        $region42: #{tpu_custom_call.1} parent=39 // pred_check_branch
          %240 = sbr.rel (%p238) target = $region44
        $region43: #{tpu_custom_call.1} parent=39 // pred_region
          %241 = dma.done %s234, 1024
        $region44: #{tpu_custom_call.1} parent=39 // pred_fallthru
          _
        // Predicated region
        $region45: #{tpu_custom_call.1} parent=39 // pred_check
          %p242 = pneg %p65
        $region46: #{tpu_custom_call.1} parent=39 // pred_check_branch
          %244 = sbr.rel (%p242) target = $region48
        $region47: #{tpu_custom_call.1} parent=39 // pred_region
          %245 = dma.done [#allocation6], 1024
        $region48: #{tpu_custom_call.1} parent=39 // pred_fallthru
          _
        // Predicated region
        $region49: #{tpu_custom_call.1} parent=39 // pred_check
          %p246 = pneg %p107
        $region50: #{tpu_custom_call.1} parent=39 // pred_check_branch
          %248 = sbr.rel (%p246) target = $region52
        $region51: #{tpu_custom_call.1} parent=39 // pred_region
          %249 = dma.done [#allocation6], 1024
        $region52: #{tpu_custom_call.1} parent=39 // pred_fallthru
          _
        %s250 = sand.u32 %s31, 1
        %s251 = scalar_lea.sflag [#allocation3], %s250
        %s252 = sand.u32 %s31, 1
        %s253 = smul.addr %s252, 64
        %s254 = scalar_lea.vmem [#allocation2], %s253
        %p255 = pneg %p44
        %p256 = pneg %p41
        %p257 = pneg %p65
        %p258 = pneg %p62
        %p259 = pneg %p86
        %p260 = pneg %p83
        %p261 = pneg %p107
        %p262 = pneg %p104
        %p263 = pneg %p128
        %p264 = pneg %p125
        %p265 = pneg %p154
        %p266 = pneg %p151
        %s267 = sand.u32 %s141, 1
        %s268 = scalar_lea.sflag [#allocation4], %s267
        %s269 = sand.u32 %s141, 1
        %s270 = smul.addr %s269, 128
        %s271 = scalar_lea.vmem [#allocation8], %s270
        %s272 = smul.u32 16, %s23
        %s273 = smul.u32 16, %s23
        %v275 = vld [vmem:[%s237] sm:$0xf]
        %v276 = vld [vmem:[%s237 + $0x4] sm:$0xf]
        %v277 = vld [vmem:[%s237 + $0x8] sm:$0xf]
        %v278 = vld [vmem:[%s237 + $0xc] sm:$0xf]
        %v279 = vld [vmem:[%s237 + $0x10] sm:$0xf]
        %v280 = vld [vmem:[%s237 + $0x14] sm:$0xf]
        %v281 = vld [vmem:[%s237 + $0x18] sm:$0xf]
        %v282 = vld [vmem:[%s237 + $0x1c] sm:$0xf]
        %v283 = vld [vmem:[%s237 + $0x20] sm:$0xf]
        %v284 = vld [vmem:[%s237 + $0x24] sm:$0xf]
        %v285 = vld [vmem:[%s237 + $0x28] sm:$0xf]
        %v286 = vld [vmem:[%s237 + $0x2c] sm:$0xf]
        %v287 = vld [vmem:[%s237 + $0x30] sm:$0xf]
        %v288 = vld [vmem:[%s237 + $0x34] sm:$0xf]
        %v289 = vld [vmem:[%s237 + $0x38] sm:$0xf]
        %v290 = vld [vmem:[%s237 + $0x3c] sm:$0xf]
        %v291 = vld [vmem:[%s2] sm:$0x1]
        %v292 = vld [vmem:[#allocation5] sm:$0xf]
        %v293 = vld [vmem:[#allocation5 + $0x4] sm:$0xf]
        %v294 = vld [vmem:[#allocation5 + $0x8] sm:$0xf]
        %v295 = vld [vmem:[#allocation5 + $0xc] sm:$0xf]
        %v296 = vld [vmem:[#allocation5 + $0x10] sm:$0xf]
        %v297 = vld [vmem:[#allocation5 + $0x14] sm:$0xf]
        %v298 = vld [vmem:[#allocation5 + $0x18] sm:$0xf]
        %v299 = vld [vmem:[#allocation5 + $0x1c] sm:$0xf]
        %v300 = vld [vmem:[#allocation5 + $0x20] sm:$0xf]
        %v301 = vld [vmem:[#allocation5 + $0x24] sm:$0xf]
        %v302 = vld [vmem:[#allocation5 + $0x28] sm:$0xf]
        %v303 = vld [vmem:[#allocation5 + $0x2c] sm:$0xf]
        %v304 = vld [vmem:[#allocation5 + $0x30] sm:$0xf]
        %v305 = vld [vmem:[#allocation5 + $0x34] sm:$0xf]
        %v306 = vld [vmem:[#allocation5 + $0x38] sm:$0xf]
        %v307 = vld [vmem:[#allocation5 + $0x3c] sm:$0xf]
        %v324 = vunpack.c.l.b16 %v275
        %v325 = vunpack.c.l.b16 %v276
        %v326 = vunpack.c.l.b16 %v277
        %v327 = vunpack.c.l.b16 %v278
        %v328 = vunpack.c.l.b16 %v279
        %v329 = vunpack.c.l.b16 %v280
        %v330 = vunpack.c.l.b16 %v281
        %v331 = vunpack.c.l.b16 %v282
        %v332 = vunpack.c.l.b16 %v283
        %v333 = vunpack.c.l.b16 %v284
        %v334 = vunpack.c.l.b16 %v285
        %v335 = vunpack.c.l.b16 %v286
        %v336 = vunpack.c.l.b16 %v287
        %v337 = vunpack.c.l.b16 %v288
        %v338 = vunpack.c.l.b16 %v289
        %v339 = vunpack.c.l.b16 %v290
        %v340 = vpack.c.b16 %v325, %v324
        %v341 = vpack.c.b16 %v327, %v326
        %v342 = vpack.c.b16 %v329, %v328
        %v343 = vpack.c.b16 %v331, %v330
        %v344 = vpack.c.b16 %v333, %v332
        %v345 = vpack.c.b16 %v335, %v334
        %v346 = vpack.c.b16 %v337, %v336
        %v347 = vpack.c.b16 %v339, %v338
        %v372 = vunpack.c.l.b16 %v292
        %v373 = vunpack.c.l.b16 %v293
        %v374 = vunpack.c.l.b16 %v294
        %v375 = vunpack.c.l.b16 %v295
        %v376 = vunpack.c.l.b16 %v296
        %v377 = vunpack.c.l.b16 %v297
        %v378 = vunpack.c.l.b16 %v298
        %v379 = vunpack.c.l.b16 %v299
        %v380 = vunpack.c.l.b16 %v300
        %v381 = vunpack.c.l.b16 %v301
        %v382 = vunpack.c.l.b16 %v302
        %v383 = vunpack.c.l.b16 %v303
        %v384 = vunpack.c.l.b16 %v304
        %v385 = vunpack.c.l.b16 %v305
        %v386 = vunpack.c.l.b16 %v306
        %v387 = vunpack.c.l.b16 %v307
        %v388 = vpack.c.b16 %v373, %v372
        %v389 = vpack.c.b16 %v375, %v374
        %v390 = vpack.c.b16 %v377, %v376
        %v391 = vpack.c.b16 %v379, %v378
        %v392 = vpack.c.b16 %v381, %v380
        %v393 = vpack.c.b16 %v383, %v382
        %v394 = vpack.c.b16 %v385, %v384
        %v395 = vpack.c.b16 %v387, %v386
        %404 = vmatprep.subr.bf16.mxu0 0
        %405 = vmatpush1.bf16.msra.mxu0 %v388
        %406 = vmatprep.subr.bf16.mxu0 0
        %407 = vmatpush1.bf16.msra.mxu0 %v389
        %408 = vmatprep.subr.bf16.mxu0 0
        %409 = vmatpush1.bf16.msra.mxu0 %v390
        %410 = vmatprep.subr.bf16.mxu0 0
        %411 = vmatpush1.bf16.msra.mxu0 %v391
        %412 = vmatprep.subr.bf16.mxu0 0
        %413 = vmatpush1.bf16.msra.mxu0 %v392
        %414 = vmatprep.subr.bf16.mxu0 0
        %415 = vmatpush1.bf16.msra.mxu0 %v393
        %416 = vmatprep.subr.bf16.mxu0 0
        %417 = vmatpush1.bf16.msra.mxu0 %v394
        %418 = vmatprep.subr.bf16.mxu0 0
        %419 = vmatpush1.bf16.msra.mxu0 %v395
        %420 = vmatprep.subr.bf16.mxu0 0
        %421 = vmatpush1.bf16.msra.mxu0 0
        %422 = vmatprep.subr.bf16.mxu0 0
        %423 = vmatpush1.bf16.msra.mxu0 0
        %424 = vmatprep.subr.bf16.mxu0 0
        %425 = vmatpush1.bf16.msra.mxu0 0
        %426 = vmatprep.subr.bf16.mxu0 0
        %427 = vmatpush1.bf16.msra.mxu0 0
        %428 = vmatprep.subr.bf16.mxu0 0
        %429 = vmatpush1.bf16.msra.mxu0 0
        %430 = vmatprep.subr.bf16.mxu0 0
        %431 = vmatpush1.bf16.msra.mxu0 0
        %432 = vmatprep.subr.bf16.mxu0 0
        %433 = vmatpush1.bf16.msra.mxu0 0
        %434 = vmatprep.subr.bf16.mxu0 0
        %435 = vmatpush1.bf16.msra.mxu0 0
        %436 = vmatprep.mubr.bf16.mxu0 0
        %437 = vmatmul.mubr.bf16.gmra.mrb[0].mxu0 %v340
        %v438 = vpop.f32.mrb[0].mxu0
        %v439 = vadd.f32 0.0, %v438
        %v440 = vpop.f32.mrb[0].mxu0
        %v441 = vpop.f32.mrb[0].mxu0
        %v442 = vadd.f32 0.0, %v441
        %v443 = vpop.f32.mrb[0].mxu0
        %444 = vmatprep.mubr.bf16.mxu0 0
        %445 = vmatmul.mubr.bf16.gmra.mrb[0].mxu0 %v341
        %v446 = vpop.f32.mrb[0].mxu0
        %v447 = vadd.f32 0.0, %v446
        %v448 = vpop.f32.mrb[0].mxu0
        %v449 = vpop.f32.mrb[0].mxu0
        %v450 = vadd.f32 0.0, %v449
        %v451 = vpop.f32.mrb[0].mxu0
        %452 = vmatprep.mubr.bf16.mxu0 0
        %453 = vmatmul.mubr.bf16.gmra.mrb[0].mxu0 %v342
        %v454 = vpop.f32.mrb[0].mxu0
        %v455 = vadd.f32 0.0, %v454
        %v456 = vpop.f32.mrb[0].mxu0
        %v457 = vpop.f32.mrb[0].mxu0
        %v458 = vadd.f32 0.0, %v457
        %v459 = vpop.f32.mrb[0].mxu0
        %460 = vmatprep.mubr.bf16.mxu0 0
        %461 = vmatmul.mubr.bf16.gmra.mrb[0].mxu0 %v343
        %v462 = vpop.f32.mrb[0].mxu0
        %v463 = vadd.f32 0.0, %v462
        %v464 = vpop.f32.mrb[0].mxu0
        %v465 = vpop.f32.mrb[0].mxu0
        %v466 = vadd.f32 0.0, %v465
        %v467 = vpop.f32.mrb[0].mxu0
        %468 = vmatprep.mubr.bf16.mxu0 0
        %469 = vmatmul.mubr.bf16.gmra.mrb[0].mxu0 %v344
        %v470 = vpop.f32.mrb[0].mxu0
        %v471 = vadd.f32 0.0, %v470
        %v472 = vpop.f32.mrb[0].mxu0
        %v473 = vpop.f32.mrb[0].mxu0
        %v474 = vadd.f32 0.0, %v473
        %v475 = vpop.f32.mrb[0].mxu0
        %476 = vmatprep.mubr.bf16.mxu0 0
        %477 = vmatmul.mubr.bf16.gmra.mrb[0].mxu0 %v345
        %v478 = vpop.f32.mrb[0].mxu0
        %v479 = vadd.f32 0.0, %v478
        %v480 = vpop.f32.mrb[0].mxu0
        %v481 = vpop.f32.mrb[0].mxu0
        %v482 = vadd.f32 0.0, %v481
        %v483 = vpop.f32.mrb[0].mxu0
        %484 = vmatprep.mubr.bf16.mxu0 0
        %485 = vmatmul.mubr.bf16.gmra.mrb[0].mxu0 %v346
        %v486 = vpop.f32.mrb[0].mxu0
        %v487 = vadd.f32 0.0, %v486
        %v488 = vpop.f32.mrb[0].mxu0
        %v489 = vpop.f32.mrb[0].mxu0
        %v490 = vadd.f32 0.0, %v489
        %v491 = vpop.f32.mrb[0].mxu0
        %492 = vmatprep.mubr.bf16.mxu0 0
        %493 = vmatmul.mubr.bf16.gmra.mrb[0].mxu0 %v347
        %v494 = vpop.f32.mrb[0].mxu0
        %v495 = vadd.f32 0.0, %v494
        %v496 = vpop.f32.mrb[0].mxu0
        %v497 = vpop.f32.mrb[0].mxu0
        %v498 = vadd.f32 0.0, %v497
        %v499 = vpop.f32.mrb[0].mxu0
        %500 = vdwg.mxu0
        %v502 = vlaneseq
        %v503 = vshrl.u32 %v502, 7
        %v504 = vsub.s32 0, %v503
        %v505 = vrot.slane %v291, %v504
        %v507 = vadd.f32 %v505, %v439
        %v508 = vadd.f32 %v505, %v442
        %v509 = vadd.f32 %v505, %v447
        %v510 = vadd.f32 %v505, %v450
        %v511 = vadd.f32 %v505, %v455
        %v512 = vadd.f32 %v505, %v458
        %v513 = vadd.f32 %v505, %v463
        %v514 = vadd.f32 %v505, %v466
        %v515 = vadd.f32 %v505, %v471
        %v516 = vadd.f32 %v505, %v474
        %v517 = vadd.f32 %v505, %v479
        %v518 = vadd.f32 %v505, %v482
        %v519 = vadd.f32 %v505, %v487
        %v520 = vadd.f32 %v505, %v490
        %v521 = vadd.f32 %v505, %v495
        %v522 = vadd.f32 %v505, %v498
        %v523 = vmax.f32 %v507, 0.0
        %v524 = vmax.f32 %v508, 0.0
        %v525 = vmax.f32 %v509, 0.0
        %v526 = vmax.f32 %v510, 0.0
        %v527 = vmax.f32 %v511, 0.0
        %v528 = vmax.f32 %v512, 0.0
        %v529 = vmax.f32 %v513, 0.0
        %v530 = vmax.f32 %v514, 0.0
        %v531 = vmax.f32 %v515, 0.0
        %v532 = vmax.f32 %v516, 0.0
        %v533 = vmax.f32 %v517, 0.0
        %v534 = vmax.f32 %v518, 0.0
        %v535 = vmax.f32 %v519, 0.0
        %v536 = vmax.f32 %v520, 0.0
        %v537 = vmax.f32 %v521, 0.0
        %v538 = vmax.f32 %v522, 0.0
        %v539 = vld [vmem:[%s4] sm:$0x1]
        %v540 = vpack.c.bf16 %v524, %v523
        %v541 = vpack.c.bf16 %v526, %v525
        %v542 = vpack.c.bf16 %v528, %v527
        %v543 = vpack.c.bf16 %v530, %v529
        %v544 = vpack.c.bf16 %v532, %v531
        %v545 = vpack.c.bf16 %v534, %v533
        %v546 = vpack.c.bf16 %v536, %v535
        %v547 = vpack.c.bf16 %v538, %v537
        %v548 = vld [vmem:[#allocation7] sm:$0xf]
        %v549 = vld [vmem:[#allocation7 + $0x4] sm:$0xf]
        %v550 = vld [vmem:[#allocation7 + $0x8] sm:$0xf]
        %v551 = vld [vmem:[#allocation7 + $0xc] sm:$0xf]
        %v552 = vld [vmem:[#allocation7 + $0x10] sm:$0xf]
        %v553 = vld [vmem:[#allocation7 + $0x14] sm:$0xf]
        %v554 = vld [vmem:[#allocation7 + $0x18] sm:$0xf]
        %v555 = vld [vmem:[#allocation7 + $0x1c] sm:$0xf]
        %v556 = vld [vmem:[#allocation7 + $0x20] sm:$0xf]
        %v557 = vld [vmem:[#allocation7 + $0x24] sm:$0xf]
        %v558 = vld [vmem:[#allocation7 + $0x28] sm:$0xf]
        %v559 = vld [vmem:[#allocation7 + $0x2c] sm:$0xf]
        %v560 = vld [vmem:[#allocation7 + $0x30] sm:$0xf]
        %v561 = vld [vmem:[#allocation7 + $0x34] sm:$0xf]
        %v562 = vld [vmem:[#allocation7 + $0x38] sm:$0xf]
        %v563 = vld [vmem:[#allocation7 + $0x3c] sm:$0xf]
        %v580 = vunpack.c.l.b16 %v548
        %v581 = vunpack.c.l.b16 %v549
        %v582 = vunpack.c.l.b16 %v550
        %v583 = vunpack.c.l.b16 %v551
        %v584 = vunpack.c.l.b16 %v552
        %v585 = vunpack.c.l.b16 %v553
        %v586 = vunpack.c.l.b16 %v554
        %v587 = vunpack.c.l.b16 %v555
        %v588 = vunpack.c.l.b16 %v556
        %v589 = vunpack.c.l.b16 %v557
        %v590 = vunpack.c.l.b16 %v558
        %v591 = vunpack.c.l.b16 %v559
        %v592 = vunpack.c.l.b16 %v560
        %v593 = vunpack.c.l.b16 %v561
        %v594 = vunpack.c.l.b16 %v562
        %v595 = vunpack.c.l.b16 %v563
        %v596 = vpack.c.b16 %v581, %v580
        %v597 = vpack.c.b16 %v583, %v582
        %v598 = vpack.c.b16 %v585, %v584
        %v599 = vpack.c.b16 %v587, %v586
        %v600 = vpack.c.b16 %v589, %v588
        %v601 = vpack.c.b16 %v591, %v590
        %v602 = vpack.c.b16 %v593, %v592
        %v603 = vpack.c.b16 %v595, %v594
        %612 = vmatprep.subr.bf16.mxu0 0
        %613 = vmatpush1.bf16.msra.mxu0 %v596
        %614 = vmatprep.subr.bf16.mxu0 0
        %615 = vmatpush1.bf16.msra.mxu0 %v597
        %616 = vmatprep.subr.bf16.mxu0 0
        %617 = vmatpush1.bf16.msra.mxu0 %v598
        %618 = vmatprep.subr.bf16.mxu0 0
        %619 = vmatpush1.bf16.msra.mxu0 %v599
        %620 = vmatprep.subr.bf16.mxu0 0
        %621 = vmatpush1.bf16.msra.mxu0 %v600
        %622 = vmatprep.subr.bf16.mxu0 0
        %623 = vmatpush1.bf16.msra.mxu0 %v601
        %624 = vmatprep.subr.bf16.mxu0 0
        %625 = vmatpush1.bf16.msra.mxu0 %v602
        %626 = vmatprep.subr.bf16.mxu0 0
        %627 = vmatpush1.bf16.msra.mxu0 %v603
        %628 = vmatprep.subr.bf16.mxu0 0
        %629 = vmatpush1.bf16.msra.mxu0 0
        %630 = vmatprep.subr.bf16.mxu0 0
        %631 = vmatpush1.bf16.msra.mxu0 0
        %632 = vmatprep.subr.bf16.mxu0 0
        %633 = vmatpush1.bf16.msra.mxu0 0
        %634 = vmatprep.subr.bf16.mxu0 0
        %635 = vmatpush1.bf16.msra.mxu0 0
        %636 = vmatprep.subr.bf16.mxu0 0
        %637 = vmatpush1.bf16.msra.mxu0 0
        %638 = vmatprep.subr.bf16.mxu0 0
        %639 = vmatpush1.bf16.msra.mxu0 0
        %640 = vmatprep.subr.bf16.mxu0 0
        %641 = vmatpush1.bf16.msra.mxu0 0
        %642 = vmatprep.subr.bf16.mxu0 0
        %643 = vmatpush1.bf16.msra.mxu0 0
        %644 = vmatprep.mubr.bf16.mxu0 0
        %645 = vmatmul.mubr.bf16.gmra.mrb[0].mxu0 %v540
        %v646 = vpop.f32.mrb[0].mxu0
        %v647 = vadd.f32 0.0, %v646
        %v648 = vpop.f32.mrb[0].mxu0
        %v649 = vpop.f32.mrb[0].mxu0
        %v650 = vadd.f32 0.0, %v649
        %v651 = vpop.f32.mrb[0].mxu0
        %652 = vmatprep.mubr.bf16.mxu0 0
        %653 = vmatmul.mubr.bf16.gmra.mrb[0].mxu0 %v541
        %v654 = vpop.f32.mrb[0].mxu0
        %v655 = vadd.f32 0.0, %v654
        %v656 = vpop.f32.mrb[0].mxu0
        %v657 = vpop.f32.mrb[0].mxu0
        %v658 = vadd.f32 0.0, %v657
        %v659 = vpop.f32.mrb[0].mxu0
        %660 = vmatprep.mubr.bf16.mxu0 0
        %661 = vmatmul.mubr.bf16.gmra.mrb[0].mxu0 %v542
        %v662 = vpop.f32.mrb[0].mxu0
        %v663 = vadd.f32 0.0, %v662
        %v664 = vpop.f32.mrb[0].mxu0
        %v665 = vpop.f32.mrb[0].mxu0
        %v666 = vadd.f32 0.0, %v665
        %v667 = vpop.f32.mrb[0].mxu0
        %668 = vmatprep.mubr.bf16.mxu0 0
        %669 = vmatmul.mubr.bf16.gmra.mrb[0].mxu0 %v543
        %v670 = vpop.f32.mrb[0].mxu0
        %v671 = vadd.f32 0.0, %v670
        %v672 = vpop.f32.mrb[0].mxu0
        %v673 = vpop.f32.mrb[0].mxu0
        %v674 = vadd.f32 0.0, %v673
        %v675 = vpop.f32.mrb[0].mxu0
        %676 = vmatprep.mubr.bf16.mxu0 0
        %677 = vmatmul.mubr.bf16.gmra.mrb[0].mxu0 %v544
        %v678 = vpop.f32.mrb[0].mxu0
        %v679 = vadd.f32 0.0, %v678
        %v680 = vpop.f32.mrb[0].mxu0
        %v681 = vpop.f32.mrb[0].mxu0
        %v682 = vadd.f32 0.0, %v681
        %v683 = vpop.f32.mrb[0].mxu0
        %684 = vmatprep.mubr.bf16.mxu0 0
        %685 = vmatmul.mubr.bf16.gmra.mrb[0].mxu0 %v545
        %v686 = vpop.f32.mrb[0].mxu0
        %v687 = vadd.f32 0.0, %v686
        %v688 = vpop.f32.mrb[0].mxu0
        %v689 = vpop.f32.mrb[0].mxu0
        %v690 = vadd.f32 0.0, %v689
        %v691 = vpop.f32.mrb[0].mxu0
        %692 = vmatprep.mubr.bf16.mxu0 0
        %693 = vmatmul.mubr.bf16.gmra.mrb[0].mxu0 %v546
        %v694 = vpop.f32.mrb[0].mxu0
        %v695 = vadd.f32 0.0, %v694
        %v696 = vpop.f32.mrb[0].mxu0
        %v697 = vpop.f32.mrb[0].mxu0
        %v698 = vadd.f32 0.0, %v697
        %v699 = vpop.f32.mrb[0].mxu0
        %700 = vmatprep.mubr.bf16.mxu0 0
        %701 = vmatmul.mubr.bf16.gmra.mrb[0].mxu0 %v547
        %v702 = vpop.f32.mrb[0].mxu0
        %v703 = vadd.f32 0.0, %v702
        %v704 = vpop.f32.mrb[0].mxu0
        %v705 = vpop.f32.mrb[0].mxu0
        %v706 = vadd.f32 0.0, %v705
        %v707 = vpop.f32.mrb[0].mxu0
        %708 = vdwg.mxu0
        %v710 = vlaneseq
        %v711 = vshrl.u32 %v710, 7
        %v712 = vsub.s32 0, %v711
        %v713 = vrot.slane %v539, %v712
        %v715 = vadd.f32 %v713, %v647
        %v716 = vadd.f32 %v713, %v650
        %v717 = vadd.f32 %v713, %v655
        %v718 = vadd.f32 %v713, %v658
        %v719 = vadd.f32 %v713, %v663
        %v720 = vadd.f32 %v713, %v666
        %v721 = vadd.f32 %v713, %v671
        %v722 = vadd.f32 %v713, %v674
        %v723 = vadd.f32 %v713, %v679
        %v724 = vadd.f32 %v713, %v682
        %v725 = vadd.f32 %v713, %v687
        %v726 = vadd.f32 %v713, %v690
        %v727 = vadd.f32 %v713, %v695
        %v728 = vadd.f32 %v713, %v698
        %v729 = vadd.f32 %v713, %v703
        %v730 = vadd.f32 %v713, %v706
        %731 = vst [vmem:[%s271] sm:$0xff] %v715
        %732 = vst [vmem:[%s271 + $0x8] sm:$0xff] %v716
        %733 = vst [vmem:[%s271 + $0x10] sm:$0xff] %v717
        %734 = vst [vmem:[%s271 + $0x18] sm:$0xff] %v718
        %735 = vst [vmem:[%s271 + $0x20] sm:$0xff] %v719
        %736 = vst [vmem:[%s271 + $0x28] sm:$0xff] %v720
        %737 = vst [vmem:[%s271 + $0x30] sm:$0xff] %v721
        %738 = vst [vmem:[%s271 + $0x38] sm:$0xff] %v722
        %739 = vst [vmem:[%s271 + $0x40] sm:$0xff] %v723
        %740 = vst [vmem:[%s271 + $0x48] sm:$0xff] %v724
        %741 = vst [vmem:[%s271 + $0x50] sm:$0xff] %v725
        %742 = vst [vmem:[%s271 + $0x58] sm:$0xff] %v726
        %743 = vst [vmem:[%s271 + $0x60] sm:$0xff] %v727
        %744 = vst [vmem:[%s271 + $0x68] sm:$0xff] %v728
        %745 = vst [vmem:[%s271 + $0x70] sm:$0xff] %v729
        %746 = vst [vmem:[%s271 + $0x78] sm:$0xff] %v730
        %s747 = sand.u32 %s141, 1
        %s748 = scalar_lea.sflag [#allocation4], %s747
        %s749 = sand.u32 %s141, 1
        %s750 = smul.addr %s749, 128
        %s751 = scalar_lea.vmem [#allocation8], %s750
        // Predicated region
        $region53: #{tpu_custom_call.1} parent=39 // pred_check
          %p752 = pneg %p151
        $region54: #{tpu_custom_call.1} parent=39 // pred_check_branch
          %754 = sbr.rel (%p752) target = $region56
        $region55: #{tpu_custom_call.1} parent=39 // pred_region
          %s755 = smul.u32 16, %s23
          %s757 = ssub.s32 2048, 2048
          %758 = vsyncadd %s748, %s757
          %s759 = smul.addr %s755, 128
          %s760 = scalar_lea.hbm %s5, %s759
          %s761 = sshll.u32 %s751, 4
          %s762 = int_to_ptr.vmem [resolvable:$true] %s761
          %767 = dma.vmem_to_hbm [thread:$0]  %s762, 2048, %s760, %s748, 128, 128, 8
        $region56: #{tpu_custom_call.1} parent=39 // pred_fallthru
          _
      $region40: #{tpu_custom_call.1} parent=5 // pred_fallthru
        _
      %p768 = scmp.le.s32.totalorder 2, %s18
      // Predicated region
      $region57: #{tpu_custom_call.1} parent=5 // pred_check
        %p769 = pneg %p768
      $region58: #{tpu_custom_call.1} parent=5 // pred_check_branch
        %771 = sbr.rel (%p769) target = $region60
      $region59: #{tpu_custom_call.1} parent=5 // pred_region
        %s772 = ssub.s32 %s18, 2
        // Predicated region
        $region61: #{tpu_custom_call.1} parent=59 // pred_check
          %p773 = pneg %p157
        $region62: #{tpu_custom_call.1} parent=59 // pred_check_branch
          %775 = sbr.rel (%p773) target = $region64
        $region63: #{tpu_custom_call.1} parent=59 // pred_region
          %s776 = sand.u32 %s142, 1
          %s777 = scalar_lea.sflag [#allocation4], %s776
          %s778 = sand.u32 %s142, 1
          %s779 = smul.addr %s778, 128
          %s780 = scalar_lea.vmem [#allocation8], %s779
          %781 = dma.done %s777, 2048
        $region64: #{tpu_custom_call.1} parent=59 // pred_fallthru
          _
      $region60: #{tpu_custom_call.1} parent=5 // pred_fallthru
        _
    $region6: #{tpu_custom_call.1} parent=1 // loop_footer
      %s22 = sadd.s32 1, %s18
    $region7: #{tpu_custom_call.1} parent=1 // loop_footer_branch
      %17 = sbr.rel target = $region3
    $region8: #{tpu_custom_call.1} parent=1 // loop_exit
      _
    %782 = vsyncpa [#allocation3], 1
    %s783 = scalar_lea.sflag [#allocation3], 1
    %784 = vsyncpa %s783, 1
    %785 = vsyncpa [#allocation6], 1
    %786 = vsyncpa [#allocation4], 1
    %s787 = scalar_lea.sflag [#allocation4], 1
    %788 = vsyncpa %s787, 1

</llo_original>
